<compile_context>
chip_gen: v7x
topology: tpu7x:2x2x1
jax: 0.10.0
libtpu: 0.0.40
codegen_flags: <defaults>
</compile_context>

<pallas_src>
import functools

import jax
import jax.numpy as jnp
from jax.experimental import pallas as pl
from jax.experimental.pallas import tpu as pltpu


def _round_up(n, m):
    return ((n + m - 1) // m) * m


def _sigmoid_f32(x):
    # One EUP transcendental (tanh) instead of exp + divide.
    return 0.5 * jnp.tanh(0.5 * x) + 0.5


def sae_kernel(x_ref,
               w1_ref, b1_ref,
               w2_ref, b2_ref,
               w3_ref, b3_ref,
               w4_ref, b4_ref,
               o_ref):
    # x tile and weights are bf16 (MXU-native); accumulate in f32, do the
    # bias add + activation in f32, re-cast to bf16 only for the next matmul.
    x = x_ref[...]

    def layer(h_bf16, w_ref, b_ref, activate):
        y = jnp.dot(h_bf16, w_ref[...], preferred_element_type=jnp.float32)
        y = y + b_ref[...]
        if activate:
            y = _sigmoid_f32(y)
        return y

    h1 = layer(x, w1_ref, b1_ref, True).astype(jnp.bfloat16)
    h2 = layer(h1, w2_ref, b2_ref, True).astype(jnp.bfloat16)
    h3 = layer(h2, w3_ref, b3_ref, True).astype(jnp.bfloat16)
    out = layer(h3, w4_ref, b4_ref, False)

    o_ref[...] = out.astype(o_ref.dtype)


def sae_forward(x, params, *, tb=None):
    """Forward pass of the 4-layer SAE.

    params = (w1, b1, w2, b2, w3, b3, w4, b4); wi: (in, out), bi: (1, out),
    i.e. y = x @ W + b (W is the transpose of PyTorch's nn.Linear weight).
    """
    w1, b1, w2, b2, w3, b3, w4, b4 = params
    B, F = x.shape
    H1, H2, H3 = w1.shape[1], w2.shape[1], w3.shape[1]

    # --- lane-dense padding: every feature dim -> multiple of 128 ----------
    Fp = _round_up(F, 128)
    H1p, H2p, H3p = (_round_up(h, 128) for h in (H1, H2, H3))

    # --- batch tile: multiple of 8 sublanes, capped so tiles fit v7x VMEM --
    if tb is None:
        tb = min(512, _round_up(B, 8))
    Bp = _round_up(B, tb)

    def pad2(a, rows, cols, dtype):
        return jnp.pad(a, ((0, rows - a.shape[0]),
                           (0, cols - a.shape[1]))).astype(dtype)

    xp = pad2(x, Bp, Fp, jnp.bfloat16)
    w1p = pad2(w1, Fp, H1p, jnp.bfloat16)
    w2p = pad2(w2, H1p, H2p, jnp.bfloat16)
    w3p = pad2(w3, H2p, H3p, jnp.bfloat16)
    w4p = pad2(w4, H3p, Fp, jnp.bfloat16)
    b1p = pad2(b1, 1, H1p, jnp.float32)
    b2p = pad2(b2, 1, H2p, jnp.float32)
    b3p = pad2(b3, 1, H3p, jnp.float32)
    b4p = pad2(b4, 1, Fp, jnp.float32)
    # Padded hidden units see pre-activation 0 -> sigmoid(0)=0.5, but the
    # corresponding rows in the next weight matrix are zero, so the result
    # is exact; padded output columns are zero and sliced off below.

    grid = (pl.cdiv(Bp, tb),)

    def tile_spec(shape):
        return pl.BlockSpec(shape, lambda i: (i, 0))

    def resident_spec(shape):
        return pl.BlockSpec(shape, lambda i: (0, 0))

    in_specs = [
        tile_spec((tb, Fp)),            # x
        resident_spec((Fp, H1p)), resident_spec((1, H1p)),   # fc1
        resident_spec((H1p, H2p)), resident_spec((1, H2p)),  # fc2
        resident_spec((H2p, H3p)), resident_spec((1, H3p)),  # fc3
        resident_spec((H3p, Fp)), resident_spec((1, Fp)),    # fc4
    ]
    out_specs = tile_spec((tb, Fp))

    # --- VMEM budget: double-buffered x/out tiles + resident weights -------
    weight_bytes = 2 * (Fp * H1p + H1p * H2p + H2p * H3p + H3p * Fp)
    bias_bytes = 4 * (H1p + H2p + H3p + Fp)
    tile_bytes = 2 * tb * Fp * 2 + 2 * tb * Fp * 4      # bf16 in, f32 out
    vmem_limit = min(64 << 20,
                     max(32 << 20,
                         int(1.5 * (weight_bytes + bias_bytes + tile_bytes))
                         + (1 << 20)))

    flops = 2 * Bp * (Fp * H1p + H1p * H2p + H2p * H3p + H3p * Fp)
    transcendentals = Bp * (H1p + H2p + H3p)
    bytes_accessed = (xp.size * 2 + Bp * Fp * 4
                      + weight_bytes + bias_bytes)

    out_padded = pl.pallas_call(
        sae_kernel,
        out_shape=jax.ShapeDtypeStruct((Bp, Fp), x.dtype),
        grid=grid,
        in_specs=in_specs,
        out_specs=out_specs,
        compiler_params=pltpu.CompilerParams(
            dimension_semantics=("parallel",),
            vmem_limit_bytes=vmem_limit,
        ),
        cost_estimate=pl.CostEstimate(
            flops=flops,
            transcendentals=transcendentals,
            bytes_accessed=bytes_accessed,
        ),
    )(xp, w1p, b1p, w2p, b2p, w3p, b3p, w4p, b4p)

    return out_padded[:B, :F]


def init_sae_params(key, in_features, out_feat1, out_feat2, out_feat3,
                    dtype=jnp.float32):
    """PyTorch nn.Linear-style init: U[-1/sqrt(fan_in), 1/sqrt(fan_in)]."""
    dims = [(in_features, out_feat1),
            (out_feat1, out_feat2),
            (out_feat2, out_feat3),
            (out_feat3, in_features)]
    params = []
    for (fan_in, fan_out) in dims:
        key, kw, kb = jax.random.split(key, 3)
        bound = 1.0 / jnp.sqrt(jnp.asarray(fan_in, dtype))
        w = jax.random.uniform(kw, (fan_in, fan_out), dtype,
                               minval=-bound, maxval=bound)
        b = jax.random.uniform(kb, (1, fan_out), dtype,
                               minval=-bound, maxval=bound)
        params += [w, b]
    return tuple(params)


def sae_reference(x, params):
    """Plain-JAX f32 reference matching the PyTorch forward semantics."""
    w1, b1, w2, b2, w3, b3, w4, b4 = params
    h = jax.nn.sigmoid(x @ w1 + b1)
    h = jax.nn.sigmoid(h @ w2 + b2)
    h = jax.nn.sigmoid(h @ w3 + b3)
    return h @ w4 + b4


if __name__ == "__main__":
    key = jax.random.PRNGKey(0)

    # Small shapes consistent with the module: nb_movies -> in_features.
    batch = 8
    in_features = 64        # nb_movies (synthetic)
    out_feat1, out_feat2, out_feat3 = 20, 10, 20

    key, kx = jax.random.split(key)
    x = jax.random.uniform(kx, (batch, in_features), jnp.float32)

    params = init_sae_params(key, in_features, out_feat1, out_feat2, out_feat3)

    fwd = jax.jit(functools.partial(sae_forward))
    out = jax.block_until_ready(fwd(x, params))

    ref = sae_reference(x, params)
    assert out.shape == (batch, in_features)
    # bf16 MXU inputs (f32 accumulation) -> loosened tolerance vs f32 reference.
    max_err = float(jnp.max(jnp.abs(out - ref)))
    assert jnp.allclose(out, ref, atol=3e-2, rtol=3e-2), (
        f"mismatch vs reference, max abs err = {max_err}")

    print("KERNEL_OK")
</pallas_src>

<mosaic_0001>
module attributes {stable_mosaic.version = 11 : i64} {
  func.func @sae_kernel(%arg0: i32, %arg1: memref<8x128xbf16, #tpu.memory_space<vmem>>, %arg2: memref<128x128xbf16, #tpu.memory_space<vmem>>, %arg3: memref<1x128xf32, #tpu.memory_space<vmem>>, %arg4: memref<128x128xbf16, #tpu.memory_space<vmem>>, %arg5: memref<1x128xf32, #tpu.memory_space<vmem>>, %arg6: memref<128x128xbf16, #tpu.memory_space<vmem>>, %arg7: memref<1x128xf32, #tpu.memory_space<vmem>>, %arg8: memref<128x128xbf16, #tpu.memory_space<vmem>>, %arg9: memref<1x128xf32, #tpu.memory_space<vmem>>, %arg10: memref<8x128xf32, #tpu.memory_space<vmem>>) attributes {dimension_semantics = [#tpu.dimension_semantics<parallel>], iteration_bounds = array<i64: 1>, scalar_prefetch = 0 : i64, scratch_operands = 0 : i64, tpu.core_type = #tpu.core_type<tc>, window_params = [{transform_indices = @transform_0, window_bounds = array<i64: 8, 128>}, {pipeline_mode = #tpu.pipeline_mode<synchronous>, transform_indices = @transform_1, window_bounds = array<i64: 128, 128>}, {pipeline_mode = #tpu.pipeline_mode<synchronous>, transform_indices = @transform_2, window_bounds = array<i64: 1, 128>}, {pipeline_mode = #tpu.pipeline_mode<synchronous>, transform_indices = @transform_3, window_bounds = array<i64: 128, 128>}, {pipeline_mode = #tpu.pipeline_mode<synchronous>, transform_indices = @transform_4, window_bounds = array<i64: 1, 128>}, {pipeline_mode = #tpu.pipeline_mode<synchronous>, transform_indices = @transform_5, window_bounds = array<i64: 128, 128>}, {pipeline_mode = #tpu.pipeline_mode<synchronous>, transform_indices = @transform_6, window_bounds = array<i64: 1, 128>}, {pipeline_mode = #tpu.pipeline_mode<synchronous>, transform_indices = @transform_7, window_bounds = array<i64: 128, 128>}, {pipeline_mode = #tpu.pipeline_mode<synchronous>, transform_indices = @transform_8, window_bounds = array<i64: 1, 128>}, {transform_indices = @transform_9, window_bounds = array<i64: 8, 128>}]} {
    %c0 = arith.constant 0 : index
    %c0_0 = arith.constant 0 : index
    %0 = vector.load %arg1[%c0, %c0_0] : memref<8x128xbf16, #tpu.memory_space<vmem>>, vector<8x128xbf16>
    %c0_1 = arith.constant 0 : index
    %c0_2 = arith.constant 0 : index
    %1 = vector.load %arg2[%c0_1, %c0_2] : memref<128x128xbf16, #tpu.memory_space<vmem>>, vector<128x128xbf16>
    %cst = arith.constant dense<0.000000e+00> : vector<8x128xf32>
    %2 = tpu.matmul %0, %1, %cst {dimension_numbers = #tpu.dot_dimension_numbers<[1], [0], [0], [1], [0, 0, 1, 1], [], []>} : vector<8x128xbf16>, vector<128x128xbf16>, vector<8x128xf32> -> vector<8x128xf32>
    %c0_3 = arith.constant 0 : index
    %c0_4 = arith.constant 0 : index
    %3 = vector.load %arg3[%c0_3, %c0_4] : memref<1x128xf32, #tpu.memory_space<vmem>>, vector<1x128xf32>
    %4 = vector.broadcast %3 : vector<1x128xf32> to vector<8x128xf32>
    %5 = arith.addf %2, %4 : vector<8x128xf32>
    %cst_5 = arith.constant 5.000000e-01 : f32
    %6 = vector.broadcast %cst_5 : f32 to vector<8x128xf32>
    %7 = arith.mulf %6, %5 : vector<8x128xf32>
    %8 = math.tanh %7 : vector<8x128xf32>
    %cst_6 = arith.constant 5.000000e-01 : f32
    %9 = vector.broadcast %cst_6 : f32 to vector<8x128xf32>
    %10 = arith.mulf %9, %8 : vector<8x128xf32>
    %cst_7 = arith.constant 5.000000e-01 : f32
    %11 = vector.broadcast %cst_7 : f32 to vector<8x128xf32>
    %12 = arith.addf %10, %11 : vector<8x128xf32>
    %13 = arith.truncf %12 : vector<8x128xf32> to vector<8x128xbf16>
    %c0_8 = arith.constant 0 : index
    %c0_9 = arith.constant 0 : index
    %14 = vector.load %arg4[%c0_8, %c0_9] : memref<128x128xbf16, #tpu.memory_space<vmem>>, vector<128x128xbf16>
    %cst_10 = arith.constant dense<0.000000e+00> : vector<8x128xf32>
    %15 = tpu.matmul %13, %14, %cst_10 {dimension_numbers = #tpu.dot_dimension_numbers<[1], [0], [0], [1], [0, 0, 1, 1], [], []>} : vector<8x128xbf16>, vector<128x128xbf16>, vector<8x128xf32> -> vector<8x128xf32>
    %c0_11 = arith.constant 0 : index
    %c0_12 = arith.constant 0 : index
    %16 = vector.load %arg5[%c0_11, %c0_12] : memref<1x128xf32, #tpu.memory_space<vmem>>, vector<1x128xf32>
    %17 = vector.broadcast %16 : vector<1x128xf32> to vector<8x128xf32>
    %18 = arith.addf %15, %17 : vector<8x128xf32>
    %cst_13 = arith.constant 5.000000e-01 : f32
    %19 = vector.broadcast %cst_13 : f32 to vector<8x128xf32>
    %20 = arith.mulf %19, %18 : vector<8x128xf32>
    %21 = math.tanh %20 : vector<8x128xf32>
    %cst_14 = arith.constant 5.000000e-01 : f32
    %22 = vector.broadcast %cst_14 : f32 to vector<8x128xf32>
    %23 = arith.mulf %22, %21 : vector<8x128xf32>
    %cst_15 = arith.constant 5.000000e-01 : f32
    %24 = vector.broadcast %cst_15 : f32 to vector<8x128xf32>
    %25 = arith.addf %23, %24 : vector<8x128xf32>
    %26 = arith.truncf %25 : vector<8x128xf32> to vector<8x128xbf16>
    %c0_16 = arith.constant 0 : index
    %c0_17 = arith.constant 0 : index
    %27 = vector.load %arg6[%c0_16, %c0_17] : memref<128x128xbf16, #tpu.memory_space<vmem>>, vector<128x128xbf16>
    %cst_18 = arith.constant dense<0.000000e+00> : vector<8x128xf32>
    %28 = tpu.matmul %26, %27, %cst_18 {dimension_numbers = #tpu.dot_dimension_numbers<[1], [0], [0], [1], [0, 0, 1, 1], [], []>} : vector<8x128xbf16>, vector<128x128xbf16>, vector<8x128xf32> -> vector<8x128xf32>
    %c0_19 = arith.constant 0 : index
    %c0_20 = arith.constant 0 : index
    %29 = vector.load %arg7[%c0_19, %c0_20] : memref<1x128xf32, #tpu.memory_space<vmem>>, vector<1x128xf32>
    %30 = vector.broadcast %29 : vector<1x128xf32> to vector<8x128xf32>
    %31 = arith.addf %28, %30 : vector<8x128xf32>
    %cst_21 = arith.constant 5.000000e-01 : f32
    %32 = vector.broadcast %cst_21 : f32 to vector<8x128xf32>
    %33 = arith.mulf %32, %31 : vector<8x128xf32>
    %34 = math.tanh %33 : vector<8x128xf32>
    %cst_22 = arith.constant 5.000000e-01 : f32
    %35 = vector.broadcast %cst_22 : f32 to vector<8x128xf32>
    %36 = arith.mulf %35, %34 : vector<8x128xf32>
    %cst_23 = arith.constant 5.000000e-01 : f32
    %37 = vector.broadcast %cst_23 : f32 to vector<8x128xf32>
    %38 = arith.addf %36, %37 : vector<8x128xf32>
    %39 = arith.truncf %38 : vector<8x128xf32> to vector<8x128xbf16>
    %c0_24 = arith.constant 0 : index
    %c0_25 = arith.constant 0 : index
    %40 = vector.load %arg8[%c0_24, %c0_25] : memref<128x128xbf16, #tpu.memory_space<vmem>>, vector<128x128xbf16>
    %cst_26 = arith.constant dense<0.000000e+00> : vector<8x128xf32>
    %41 = tpu.matmul %39, %40, %cst_26 {dimension_numbers = #tpu.dot_dimension_numbers<[1], [0], [0], [1], [0, 0, 1, 1], [], []>} : vector<8x128xbf16>, vector<128x128xbf16>, vector<8x128xf32> -> vector<8x128xf32>
    %c0_27 = arith.constant 0 : index
    %c0_28 = arith.constant 0 : index
    %42 = vector.load %arg9[%c0_27, %c0_28] : memref<1x128xf32, #tpu.memory_space<vmem>>, vector<1x128xf32>
    %43 = vector.broadcast %42 : vector<1x128xf32> to vector<8x128xf32>
    %44 = arith.addf %41, %43 : vector<8x128xf32>
    %c0_29 = arith.constant 0 : index
    %c0_30 = arith.constant 0 : index
    %45 = vector.load %arg10[%c0_29, %c0_30] : memref<8x128xf32, #tpu.memory_space<vmem>>, vector<8x128xf32>
    tpu.vector_store %arg10[%c0_29, %c0_30], %44 {strides = array<i32>} : memref<8x128xf32, #tpu.memory_space<vmem>>, vector<8x128xf32>,
    return
  }
  func.func @transform_0(%arg0: i32) -> (i32, i32) {
    %c0_i32 = arith.constant 0 : i32
    %c0_i32_0 = arith.constant 0 : i32
    return %arg0, %c0_i32 : i32, i32
  }
  func.func @transform_1(%arg0: i32) -> (i32, i32) {
    %c0_i32 = arith.constant 0 : i32
    %c0_i32_0 = arith.constant 0 : i32
    %c0_i32_1 = arith.constant 0 : i32
    return %c0_i32, %c0_i32_0 : i32, i32
  }
  func.func @transform_2(%arg0: i32) -> (i32, i32) {
    %c0_i32 = arith.constant 0 : i32
    %c0_i32_0 = arith.constant 0 : i32
    %c0_i32_1 = arith.constant 0 : i32
    return %c0_i32, %c0_i32_0 : i32, i32
  }
  func.func @transform_3(%arg0: i32) -> (i32, i32) {
    %c0_i32 = arith.constant 0 : i32
    %c0_i32_0 = arith.constant 0 : i32
    %c0_i32_1 = arith.constant 0 : i32
    return %c0_i32, %c0_i32_0 : i32, i32
  }
  func.func @transform_4(%arg0: i32) -> (i32, i32) {
    %c0_i32 = arith.constant 0 : i32
    %c0_i32_0 = arith.constant 0 : i32
    %c0_i32_1 = arith.constant 0 : i32
    return %c0_i32, %c0_i32_0 : i32, i32
  }
  func.func @transform_5(%arg0: i32) -> (i32, i32) {
    %c0_i32 = arith.constant 0 : i32
    %c0_i32_0 = arith.constant 0 : i32
    %c0_i32_1 = arith.constant 0 : i32
    return %c0_i32, %c0_i32_0 : i32, i32
  }
  func.func @transform_6(%arg0: i32) -> (i32, i32) {
    %c0_i32 = arith.constant 0 : i32
    %c0_i32_0 = arith.constant 0 : i32
    %c0_i32_1 = arith.constant 0 : i32
    return %c0_i32, %c0_i32_0 : i32, i32
  }
  func.func @transform_7(%arg0: i32) -> (i32, i32) {
    %c0_i32 = arith.constant 0 : i32
    %c0_i32_0 = arith.constant 0 : i32
    %c0_i32_1 = arith.constant 0 : i32
    return %c0_i32, %c0_i32_0 : i32, i32
  }
  func.func @transform_8(%arg0: i32) -> (i32, i32) {
    %c0_i32 = arith.constant 0 : i32
    %c0_i32_0 = arith.constant 0 : i32
    %c0_i32_1 = arith.constant 0 : i32
    return %c0_i32, %c0_i32_0 : i32, i32
  }
  func.func @transform_9(%arg0: i32) -> (i32, i32) {
    %c0_i32 = arith.constant 0 : i32
    %c0_i32_0 = arith.constant 0 : i32
    return %arg0, %c0_i32 : i32, i32
  }
}

</mosaic_0001>

<llo_original>
// kernel: sae_forward.1
$region0: #{sae_forward.1}
  #allocation0 [shape = 'u32[]', space=smem, size = 0x4, offset = 0x4, fixed_abs, tag = 'smem constant byte address 0x4 - core index']
  #allocation1 [shape = 'u32[144,128]{1,0:T(1,128)}', space=vmem, size = 0x12000, scoped, tag = 'internal scratch']
  %s0 = inlined_call_operand.vmem [shape: bf16[8,128], index: 0, kind: input, shape index: {}]
  %s1 = inlined_call_operand.vmem [shape: bf16[128,128], index: 1, kind: input, shape index: {}]
  %s2 = inlined_call_operand.vmem [shape: f32[1,128], index: 2, kind: input, shape index: {}]
  %s3 = inlined_call_operand.vmem [shape: bf16[128,128], index: 3, kind: input, shape index: {}]
  %s4 = inlined_call_operand.vmem [shape: f32[1,128], index: 4, kind: input, shape index: {}]
  %s5 = inlined_call_operand.vmem [shape: bf16[128,128], index: 5, kind: input, shape index: {}]
  %s6 = inlined_call_operand.vmem [shape: f32[1,128], index: 6, kind: input, shape index: {}]
  %s7 = inlined_call_operand.vmem [shape: bf16[128,128], index: 7, kind: input, shape index: {}]
  %s8 = inlined_call_operand.vmem [shape: f32[1,128], index: 8, kind: input, shape index: {}]
  %s9 = inlined_call_operand.hbm [shape: f32[8,128], index: 9, kind: output, shape index: {}]
  %s10 = sld [smem:[#allocation0]]
  $region46: #{sae_forward.1} parent=0
    _
  %s12 = ssub.s32 1, %s10
  %s13 = scalar_select 0, %s12, %s10
  $region1: #{sae_forward.1} parent=0
    #allocation2 [shape = 'u8[4096]{0}', space=vmem, size = 0x1000, scoped, tag = 'output window, operand 0, single buffered']
    #allocation3 [shape = 's32[1]{0}', space=sflag, size = 0x4, scoped, tag = 'scoped memory for sae_forward.1']
    %14 = vsyncpa [#allocation3], 0
    // Predicated region
    $region2: #{sae_forward.1} parent=1 // pred_check
      _
    $region3: #{sae_forward.1} parent=1 // pred_check_branch
      %16 = sbr.rel (0) target = $region5
    $region4: #{sae_forward.1} parent=1 // pred_region
      _
    $region5: #{sae_forward.1} parent=1 // pred_fallthru
      _
    // Predicated region
    $region6: #{sae_forward.1} parent=1 // pred_check
      _
    $region7: #{sae_forward.1} parent=1 // pred_check_branch
      %18 = sbr.rel (0) target = $region9
    $region8: #{sae_forward.1} parent=1 // pred_region
      _
    $region9: #{sae_forward.1} parent=1 // pred_fallthru
      _
    // Predicated region
    $region10: #{sae_forward.1} parent=1 // pred_check
      _
    $region11: #{sae_forward.1} parent=1 // pred_check_branch
      %20 = sbr.rel (0) target = $region13
    $region12: #{sae_forward.1} parent=1 // pred_region
      _
    $region13: #{sae_forward.1} parent=1 // pred_fallthru
      _
    // Predicated region
    $region14: #{sae_forward.1} parent=1 // pred_check
      _
    $region15: #{sae_forward.1} parent=1 // pred_check_branch
      %22 = sbr.rel (0) target = $region17
    $region16: #{sae_forward.1} parent=1 // pred_region
      _
    $region17: #{sae_forward.1} parent=1 // pred_fallthru
      _
    // Predicated region
    $region18: #{sae_forward.1} parent=1 // pred_check
      _
    $region19: #{sae_forward.1} parent=1 // pred_check_branch
      %24 = sbr.rel (0) target = $region21
    $region20: #{sae_forward.1} parent=1 // pred_region
      _
    $region21: #{sae_forward.1} parent=1 // pred_fallthru
      _
    // Predicated region
    $region22: #{sae_forward.1} parent=1 // pred_check
      _
    $region23: #{sae_forward.1} parent=1 // pred_check_branch
      %26 = sbr.rel (0) target = $region25
    $region24: #{sae_forward.1} parent=1 // pred_region
      _
    $region25: #{sae_forward.1} parent=1 // pred_fallthru
      _
    // Predicated region
    $region26: #{sae_forward.1} parent=1 // pred_check
      _
    $region27: #{sae_forward.1} parent=1 // pred_check_branch
      %28 = sbr.rel (0) target = $region29
    $region28: #{sae_forward.1} parent=1 // pred_region
      _
    $region29: #{sae_forward.1} parent=1 // pred_fallthru
      _
    // Predicated region
    $region30: #{sae_forward.1} parent=1 // pred_check
      _
    $region31: #{sae_forward.1} parent=1 // pred_check_branch
      %30 = sbr.rel (0) target = $region33
    $region32: #{sae_forward.1} parent=1 // pred_region
      _
    $region33: #{sae_forward.1} parent=1 // pred_fallthru
      _
    // Predicated region
    $region34: #{sae_forward.1} parent=1 // pred_check
      _
    $region35: #{sae_forward.1} parent=1 // pred_check_branch
      %32 = sbr.rel (0) target = $region37
    $region36: #{sae_forward.1} parent=1 // pred_region
      _
    $region37: #{sae_forward.1} parent=1 // pred_fallthru
      _
    %v34 = vld [vmem:[%s0] sm:$0xf]
    %v35 = vld [vmem:[%s1] sm:$0xf]
    %v36 = vld [vmem:[%s1 + $0x4] sm:$0xf]
    %v37 = vld [vmem:[%s1 + $0x8] sm:$0xf]
    %v38 = vld [vmem:[%s1 + $0xc] sm:$0xf]
    %v39 = vld [vmem:[%s1 + $0x10] sm:$0xf]
    %v40 = vld [vmem:[%s1 + $0x14] sm:$0xf]
    %v41 = vld [vmem:[%s1 + $0x18] sm:$0xf]
    %v42 = vld [vmem:[%s1 + $0x1c] sm:$0xf]
    %v43 = vld [vmem:[%s1 + $0x20] sm:$0xf]
    %v44 = vld [vmem:[%s1 + $0x24] sm:$0xf]
    %v45 = vld [vmem:[%s1 + $0x28] sm:$0xf]
    %v46 = vld [vmem:[%s1 + $0x2c] sm:$0xf]
    %v47 = vld [vmem:[%s1 + $0x30] sm:$0xf]
    %v48 = vld [vmem:[%s1 + $0x34] sm:$0xf]
    %v49 = vld [vmem:[%s1 + $0x38] sm:$0xf]
    %v50 = vld [vmem:[%s1 + $0x3c] sm:$0xf]
    %v51 = vld [vmem:[%s2] sm:$0x1]
    %v53 = vlaneseq
    %v54 = vshrl.u32 %v53, 7
    %v55 = vsub.s32 0, %v54
    %v56 = vrot.slane %v51, %v55
    %v74 = vunpack.c.l.b16 %v35
    %v75 = vunpack.c.l.b16 %v36
    %v76 = vunpack.c.l.b16 %v37
    %v77 = vunpack.c.l.b16 %v38
    %v78 = vunpack.c.l.b16 %v39
    %v79 = vunpack.c.l.b16 %v40
    %v80 = vunpack.c.l.b16 %v41
    %v81 = vunpack.c.l.b16 %v42
    %v82 = vunpack.c.l.b16 %v43
    %v83 = vunpack.c.l.b16 %v44
    %v84 = vunpack.c.l.b16 %v45
    %v85 = vunpack.c.l.b16 %v46
    %v86 = vunpack.c.l.b16 %v47
    %v87 = vunpack.c.l.b16 %v48
    %v88 = vunpack.c.l.b16 %v49
    %v89 = vunpack.c.l.b16 %v50
    %v90 = vpack.c.b16 %v75, %v74
    %v91 = vpack.c.b16 %v77, %v76
    %v92 = vpack.c.b16 %v79, %v78
    %v93 = vpack.c.b16 %v81, %v80
    %v94 = vpack.c.b16 %v83, %v82
    %v95 = vpack.c.b16 %v85, %v84
    %v96 = vpack.c.b16 %v87, %v86
    %v97 = vpack.c.b16 %v89, %v88
    %106 = vmatprep.subr.bf16.mxu0 0
    %107 = vmatpush1.bf16.msra.mxu0 %v90
    %108 = vmatprep.subr.bf16.mxu0 0
    %109 = vmatpush1.bf16.msra.mxu0 %v91
    %110 = vmatprep.subr.bf16.mxu0 0
    %111 = vmatpush1.bf16.msra.mxu0 %v92
    %112 = vmatprep.subr.bf16.mxu0 0
    %113 = vmatpush1.bf16.msra.mxu0 %v93
    %114 = vmatprep.subr.bf16.mxu0 0
    %115 = vmatpush1.bf16.msra.mxu0 %v94
    %116 = vmatprep.subr.bf16.mxu0 0
    %117 = vmatpush1.bf16.msra.mxu0 %v95
    %118 = vmatprep.subr.bf16.mxu0 0
    %119 = vmatpush1.bf16.msra.mxu0 %v96
    %120 = vmatprep.subr.bf16.mxu0 0
    %121 = vmatpush1.bf16.msra.mxu0 %v97
    %122 = vmatprep.subr.bf16.mxu0 0
    %123 = vmatpush1.bf16.msra.mxu0 0
    %124 = vmatprep.subr.bf16.mxu0 0
    %125 = vmatpush1.bf16.msra.mxu0 0
    %126 = vmatprep.subr.bf16.mxu0 0
    %127 = vmatpush1.bf16.msra.mxu0 0
    %128 = vmatprep.subr.bf16.mxu0 0
    %129 = vmatpush1.bf16.msra.mxu0 0
    %130 = vmatprep.subr.bf16.mxu0 0
    %131 = vmatpush1.bf16.msra.mxu0 0
    %132 = vmatprep.subr.bf16.mxu0 0
    %133 = vmatpush1.bf16.msra.mxu0 0
    %134 = vmatprep.subr.bf16.mxu0 0
    %135 = vmatpush1.bf16.msra.mxu0 0
    %136 = vmatprep.subr.bf16.mxu0 0
    %137 = vmatpush1.bf16.msra.mxu0 0
    %138 = vmatprep.mubr.bf16.mxu0 0
    %139 = vmatmul.mubr.bf16.gmra.mrb[0].mxu0 %v34
    %v140 = vpop.f32.mrb[0].mxu0
    %v141 = vadd.f32 %v56, %v140
    %v142 = vpop.f32.mrb[0].mxu0
    %v143 = vpop.f32.mrb[0].mxu0
    %v144 = vpop.f32.mrb[0].mxu0
    %145 = vdwg.mxu0
    %v146 = vmul.f32 %v141, 0.5
    %v147 = vtanh.pop %v146
    %v148 = vmul.f32 %v147, 0.5
    %v149 = vadd.f32 %v148, 0.5
    %v150 = vpack.c.bf16 %v149, %v149
    %v151 = vld [vmem:[%s3] sm:$0xf]
    %v152 = vld [vmem:[%s3 + $0x4] sm:$0xf]
    %v153 = vld [vmem:[%s3 + $0x8] sm:$0xf]
    %v154 = vld [vmem:[%s3 + $0xc] sm:$0xf]
    %v155 = vld [vmem:[%s3 + $0x10] sm:$0xf]
    %v156 = vld [vmem:[%s3 + $0x14] sm:$0xf]
    %v157 = vld [vmem:[%s3 + $0x18] sm:$0xf]
    %v158 = vld [vmem:[%s3 + $0x1c] sm:$0xf]
    %v159 = vld [vmem:[%s3 + $0x20] sm:$0xf]
    %v160 = vld [vmem:[%s3 + $0x24] sm:$0xf]
    %v161 = vld [vmem:[%s3 + $0x28] sm:$0xf]
    %v162 = vld [vmem:[%s3 + $0x2c] sm:$0xf]
    %v163 = vld [vmem:[%s3 + $0x30] sm:$0xf]
    %v164 = vld [vmem:[%s3 + $0x34] sm:$0xf]
    %v165 = vld [vmem:[%s3 + $0x38] sm:$0xf]
    %v166 = vld [vmem:[%s3 + $0x3c] sm:$0xf]
    %v167 = vld [vmem:[%s4] sm:$0x1]
    %v169 = vlaneseq
    %v170 = vshrl.u32 %v169, 7
    %v171 = vsub.s32 0, %v170
    %v172 = vrot.slane %v167, %v171
    %v190 = vunpack.c.l.b16 %v151
    %v191 = vunpack.c.l.b16 %v152
    %v192 = vunpack.c.l.b16 %v153
    %v193 = vunpack.c.l.b16 %v154
    %v194 = vunpack.c.l.b16 %v155
    %v195 = vunpack.c.l.b16 %v156
    %v196 = vunpack.c.l.b16 %v157
    %v197 = vunpack.c.l.b16 %v158
    %v198 = vunpack.c.l.b16 %v159
    %v199 = vunpack.c.l.b16 %v160
    %v200 = vunpack.c.l.b16 %v161
    %v201 = vunpack.c.l.b16 %v162
    %v202 = vunpack.c.l.b16 %v163
    %v203 = vunpack.c.l.b16 %v164
    %v204 = vunpack.c.l.b16 %v165
    %v205 = vunpack.c.l.b16 %v166
    %v206 = vpack.c.b16 %v191, %v190
    %v207 = vpack.c.b16 %v193, %v192
    %v208 = vpack.c.b16 %v195, %v194
    %v209 = vpack.c.b16 %v197, %v196
    %v210 = vpack.c.b16 %v199, %v198
    %v211 = vpack.c.b16 %v201, %v200
    %v212 = vpack.c.b16 %v203, %v202
    %v213 = vpack.c.b16 %v205, %v204
    %222 = vmatprep.subr.bf16.mxu0 0
    %223 = vmatpush1.bf16.msra.mxu0 %v206
    %224 = vmatprep.subr.bf16.mxu0 0
    %225 = vmatpush1.bf16.msra.mxu0 %v207
    %226 = vmatprep.subr.bf16.mxu0 0
    %227 = vmatpush1.bf16.msra.mxu0 %v208
    %228 = vmatprep.subr.bf16.mxu0 0
    %229 = vmatpush1.bf16.msra.mxu0 %v209
    %230 = vmatprep.subr.bf16.mxu0 0
    %231 = vmatpush1.bf16.msra.mxu0 %v210
    %232 = vmatprep.subr.bf16.mxu0 0
    %233 = vmatpush1.bf16.msra.mxu0 %v211
    %234 = vmatprep.subr.bf16.mxu0 0
    %235 = vmatpush1.bf16.msra.mxu0 %v212
    %236 = vmatprep.subr.bf16.mxu0 0
    %237 = vmatpush1.bf16.msra.mxu0 %v213
    %238 = vmatprep.subr.bf16.mxu0 0
    %239 = vmatpush1.bf16.msra.mxu0 0
    %240 = vmatprep.subr.bf16.mxu0 0
    %241 = vmatpush1.bf16.msra.mxu0 0
    %242 = vmatprep.subr.bf16.mxu0 0
    %243 = vmatpush1.bf16.msra.mxu0 0
    %244 = vmatprep.subr.bf16.mxu0 0
    %245 = vmatpush1.bf16.msra.mxu0 0
    %246 = vmatprep.subr.bf16.mxu0 0
    %247 = vmatpush1.bf16.msra.mxu0 0
    %248 = vmatprep.subr.bf16.mxu0 0
    %249 = vmatpush1.bf16.msra.mxu0 0
    %250 = vmatprep.subr.bf16.mxu0 0
    %251 = vmatpush1.bf16.msra.mxu0 0
    %252 = vmatprep.subr.bf16.mxu0 0
    %253 = vmatpush1.bf16.msra.mxu0 0
    %254 = vmatprep.mubr.bf16.mxu0 0
    %255 = vmatmul.mubr.bf16.gmra.mrb[0].mxu0 %v150
    %v256 = vpop.f32.mrb[0].mxu0
    %v257 = vadd.f32 %v172, %v256
    %v258 = vpop.f32.mrb[0].mxu0
    %v259 = vpop.f32.mrb[0].mxu0
    %v260 = vpop.f32.mrb[0].mxu0
    %261 = vdwg.mxu0
    %v262 = vmul.f32 %v257, 0.5
    %v263 = vtanh.pop %v262
    %v264 = vmul.f32 %v263, 0.5
    %v265 = vadd.f32 %v264, 0.5
    %v266 = vpack.c.bf16 %v265, %v265
    %v267 = vld [vmem:[%s5] sm:$0xf]
    %v268 = vld [vmem:[%s5 + $0x4] sm:$0xf]
    %v269 = vld [vmem:[%s5 + $0x8] sm:$0xf]
    %v270 = vld [vmem:[%s5 + $0xc] sm:$0xf]
    %v271 = vld [vmem:[%s5 + $0x10] sm:$0xf]
    %v272 = vld [vmem:[%s5 + $0x14] sm:$0xf]
    %v273 = vld [vmem:[%s5 + $0x18] sm:$0xf]
    %v274 = vld [vmem:[%s5 + $0x1c] sm:$0xf]
    %v275 = vld [vmem:[%s5 + $0x20] sm:$0xf]
    %v276 = vld [vmem:[%s5 + $0x24] sm:$0xf]
    %v277 = vld [vmem:[%s5 + $0x28] sm:$0xf]
    %v278 = vld [vmem:[%s5 + $0x2c] sm:$0xf]
    %v279 = vld [vmem:[%s5 + $0x30] sm:$0xf]
    %v280 = vld [vmem:[%s5 + $0x34] sm:$0xf]
    %v281 = vld [vmem:[%s5 + $0x38] sm:$0xf]
    %v282 = vld [vmem:[%s5 + $0x3c] sm:$0xf]
    %v283 = vld [vmem:[%s6] sm:$0x1]
    %v285 = vlaneseq
    %v286 = vshrl.u32 %v285, 7
    %v287 = vsub.s32 0, %v286
    %v288 = vrot.slane %v283, %v287
    %v306 = vunpack.c.l.b16 %v267
    %v307 = vunpack.c.l.b16 %v268
    %v308 = vunpack.c.l.b16 %v269
    %v309 = vunpack.c.l.b16 %v270
    %v310 = vunpack.c.l.b16 %v271
    %v311 = vunpack.c.l.b16 %v272
    %v312 = vunpack.c.l.b16 %v273
    %v313 = vunpack.c.l.b16 %v274
    %v314 = vunpack.c.l.b16 %v275
    %v315 = vunpack.c.l.b16 %v276
    %v316 = vunpack.c.l.b16 %v277
    %v317 = vunpack.c.l.b16 %v278
    %v318 = vunpack.c.l.b16 %v279
    %v319 = vunpack.c.l.b16 %v280
    %v320 = vunpack.c.l.b16 %v281
    %v321 = vunpack.c.l.b16 %v282
    %v322 = vpack.c.b16 %v307, %v306
    %v323 = vpack.c.b16 %v309, %v308
    %v324 = vpack.c.b16 %v311, %v310
    %v325 = vpack.c.b16 %v313, %v312
    %v326 = vpack.c.b16 %v315, %v314
    %v327 = vpack.c.b16 %v317, %v316
    %v328 = vpack.c.b16 %v319, %v318
    %v329 = vpack.c.b16 %v321, %v320
    %338 = vmatprep.subr.bf16.mxu0 0
    %339 = vmatpush1.bf16.msra.mxu0 %v322
    %340 = vmatprep.subr.bf16.mxu0 0
    %341 = vmatpush1.bf16.msra.mxu0 %v323
    %342 = vmatprep.subr.bf16.mxu0 0
    %343 = vmatpush1.bf16.msra.mxu0 %v324
    %344 = vmatprep.subr.bf16.mxu0 0
    %345 = vmatpush1.bf16.msra.mxu0 %v325
    %346 = vmatprep.subr.bf16.mxu0 0
    %347 = vmatpush1.bf16.msra.mxu0 %v326
    %348 = vmatprep.subr.bf16.mxu0 0
    %349 = vmatpush1.bf16.msra.mxu0 %v327
    %350 = vmatprep.subr.bf16.mxu0 0
    %351 = vmatpush1.bf16.msra.mxu0 %v328
    %352 = vmatprep.subr.bf16.mxu0 0
    %353 = vmatpush1.bf16.msra.mxu0 %v329
    %354 = vmatprep.subr.bf16.mxu0 0
    %355 = vmatpush1.bf16.msra.mxu0 0
    %356 = vmatprep.subr.bf16.mxu0 0
    %357 = vmatpush1.bf16.msra.mxu0 0
    %358 = vmatprep.subr.bf16.mxu0 0
    %359 = vmatpush1.bf16.msra.mxu0 0
    %360 = vmatprep.subr.bf16.mxu0 0
    %361 = vmatpush1.bf16.msra.mxu0 0
    %362 = vmatprep.subr.bf16.mxu0 0
    %363 = vmatpush1.bf16.msra.mxu0 0
    %364 = vmatprep.subr.bf16.mxu0 0
    %365 = vmatpush1.bf16.msra.mxu0 0
    %366 = vmatprep.subr.bf16.mxu0 0
    %367 = vmatpush1.bf16.msra.mxu0 0
    %368 = vmatprep.subr.bf16.mxu0 0
    %369 = vmatpush1.bf16.msra.mxu0 0
    %370 = vmatprep.mubr.bf16.mxu0 0
    %371 = vmatmul.mubr.bf16.gmra.mrb[0].mxu0 %v266
    %v372 = vpop.f32.mrb[0].mxu0
    %v373 = vadd.f32 %v288, %v372
    %v374 = vpop.f32.mrb[0].mxu0
    %v375 = vpop.f32.mrb[0].mxu0
    %v376 = vpop.f32.mrb[0].mxu0
    %377 = vdwg.mxu0
    %v378 = vmul.f32 %v373, 0.5
    %v379 = vtanh.pop %v378
    %v380 = vmul.f32 %v379, 0.5
    %v381 = vadd.f32 %v380, 0.5
    %v382 = vpack.c.bf16 %v381, %v381
    %v383 = vld [vmem:[%s7] sm:$0xf]
    %v384 = vld [vmem:[%s7 + $0x4] sm:$0xf]
    %v385 = vld [vmem:[%s7 + $0x8] sm:$0xf]
    %v386 = vld [vmem:[%s7 + $0xc] sm:$0xf]
    %v387 = vld [vmem:[%s7 + $0x10] sm:$0xf]
    %v388 = vld [vmem:[%s7 + $0x14] sm:$0xf]
    %v389 = vld [vmem:[%s7 + $0x18] sm:$0xf]
    %v390 = vld [vmem:[%s7 + $0x1c] sm:$0xf]
    %v391 = vld [vmem:[%s7 + $0x20] sm:$0xf]
    %v392 = vld [vmem:[%s7 + $0x24] sm:$0xf]
    %v393 = vld [vmem:[%s7 + $0x28] sm:$0xf]
    %v394 = vld [vmem:[%s7 + $0x2c] sm:$0xf]
    %v395 = vld [vmem:[%s7 + $0x30] sm:$0xf]
    %v396 = vld [vmem:[%s7 + $0x34] sm:$0xf]
    %v397 = vld [vmem:[%s7 + $0x38] sm:$0xf]
    %v398 = vld [vmem:[%s7 + $0x3c] sm:$0xf]
    %v399 = vld [vmem:[%s8] sm:$0x1]
    %v401 = vlaneseq
    %v402 = vshrl.u32 %v401, 7
    %v403 = vsub.s32 0, %v402
    %v404 = vrot.slane %v399, %v403
    %v422 = vunpack.c.l.b16 %v383
    %v423 = vunpack.c.l.b16 %v384
    %v424 = vunpack.c.l.b16 %v385
    %v425 = vunpack.c.l.b16 %v386
    %v426 = vunpack.c.l.b16 %v387
    %v427 = vunpack.c.l.b16 %v388
    %v428 = vunpack.c.l.b16 %v389
    %v429 = vunpack.c.l.b16 %v390
    %v430 = vunpack.c.l.b16 %v391
    %v431 = vunpack.c.l.b16 %v392
    %v432 = vunpack.c.l.b16 %v393
    %v433 = vunpack.c.l.b16 %v394
    %v434 = vunpack.c.l.b16 %v395
    %v435 = vunpack.c.l.b16 %v396
    %v436 = vunpack.c.l.b16 %v397
    %v437 = vunpack.c.l.b16 %v398
    %v438 = vpack.c.b16 %v423, %v422
    %v439 = vpack.c.b16 %v425, %v424
    %v440 = vpack.c.b16 %v427, %v426
    %v441 = vpack.c.b16 %v429, %v428
    %v442 = vpack.c.b16 %v431, %v430
    %v443 = vpack.c.b16 %v433, %v432
    %v444 = vpack.c.b16 %v435, %v434
    %v445 = vpack.c.b16 %v437, %v436
    %454 = vmatprep.subr.bf16.mxu0 0
    %455 = vmatpush1.bf16.msra.mxu0 %v438
    %456 = vmatprep.subr.bf16.mxu0 0
    %457 = vmatpush1.bf16.msra.mxu0 %v439
    %458 = vmatprep.subr.bf16.mxu0 0
    %459 = vmatpush1.bf16.msra.mxu0 %v440
    %460 = vmatprep.subr.bf16.mxu0 0
    %461 = vmatpush1.bf16.msra.mxu0 %v441
    %462 = vmatprep.subr.bf16.mxu0 0
    %463 = vmatpush1.bf16.msra.mxu0 %v442
    %464 = vmatprep.subr.bf16.mxu0 0
    %465 = vmatpush1.bf16.msra.mxu0 %v443
    %466 = vmatprep.subr.bf16.mxu0 0
    %467 = vmatpush1.bf16.msra.mxu0 %v444
    %468 = vmatprep.subr.bf16.mxu0 0
    %469 = vmatpush1.bf16.msra.mxu0 %v445
    %470 = vmatprep.subr.bf16.mxu0 0
    %471 = vmatpush1.bf16.msra.mxu0 0
    %472 = vmatprep.subr.bf16.mxu0 0
    %473 = vmatpush1.bf16.msra.mxu0 0
    %474 = vmatprep.subr.bf16.mxu0 0
    %475 = vmatpush1.bf16.msra.mxu0 0
    %476 = vmatprep.subr.bf16.mxu0 0
    %477 = vmatpush1.bf16.msra.mxu0 0
    %478 = vmatprep.subr.bf16.mxu0 0
    %479 = vmatpush1.bf16.msra.mxu0 0
    %480 = vmatprep.subr.bf16.mxu0 0
    %481 = vmatpush1.bf16.msra.mxu0 0
    %482 = vmatprep.subr.bf16.mxu0 0
    %483 = vmatpush1.bf16.msra.mxu0 0
    %484 = vmatprep.subr.bf16.mxu0 0
    %485 = vmatpush1.bf16.msra.mxu0 0
    %486 = vmatprep.mubr.bf16.mxu0 0
    %487 = vmatmul.mubr.bf16.gmra.mrb[0].mxu0 %v382
    %v488 = vpop.f32.mrb[0].mxu0
    %v489 = vadd.f32 %v404, %v488
    %v490 = vpop.f32.mrb[0].mxu0
    %v491 = vpop.f32.mrb[0].mxu0
    %v492 = vpop.f32.mrb[0].mxu0
    %493 = vdwg.mxu0
    %494 = vst [vmem:[#allocation2] sm:$0xff] %v489
    // Predicated region
    $region38: #{sae_forward.1} parent=1 // pred_check
      _
    $region39: #{sae_forward.1} parent=1 // pred_check_branch
      %496 = sbr.rel (0) target = $region41
    $region40: #{sae_forward.1} parent=1 // pred_region
      %s498 = ssub.s32 128, 128
      %499 = vsyncadd [#allocation3], %s498
      %s501 = sshll.u32 [#allocation2], 4
      %s502 = int_to_ptr.vmem [resolvable:$true] %s501
      %504 = dma.vmem_to_hbm [thread:$0]  %s502, 128, %s9, [#allocation3]
    $region41: #{sae_forward.1} parent=1 // pred_fallthru
      _
    // Predicated region
    $region42: #{sae_forward.1} parent=1 // pred_check
      _
    $region43: #{sae_forward.1} parent=1 // pred_check_branch
      %506 = sbr.rel (0) target = $region45
    $region44: #{sae_forward.1} parent=1 // pred_region
      %507 = dma.done [#allocation3], 128
    $region45: #{sae_forward.1} parent=1 // pred_fallthru
      _
    %508 = vsyncpa [#allocation3], 1

</llo_original>
